<compile_context>
chip_gen: v5e
topology: v5e:2x2
jax: 0.10.0
libtpu: 0.0.40
codegen_flags: <defaults>
</compile_context>

<pallas_src>
import jax
import jax.numpy as jnp
from jax.experimental import pallas as pl
from jax.experimental.pallas import tpu as pltpu


def _sym_view_pair_kernel(x_ref, w_ref, b_ref, o_ref, acc_ref):
    """x_ref: (tm, tk) | w_ref: (tk, N_pad) | b_ref: (1, N_pad) |
    o_ref: (tm, N_pad) | acc_ref: VMEM (tm, N_pad) f32 accumulator."""
    k = pl.program_id(1)

    @pl.when(k == 0)
    def _():
        acc_ref[...] = jnp.zeros_like(acc_ref)

    # Full-spatial conv3d for both views == one MXU matmul over the K slice.
    acc_ref[...] += jnp.dot(x_ref[...], w_ref[...],
                            preferred_element_type=jnp.float32)

    @pl.when(k == pl.num_programs(1) - 1)
    def _():
        # Bias is applied once per output tile, only in the finalize branch.
        # N_pad is a multiple of 128 -> unmasked, lane-dense stores.
        o_ref[...] = (acc_ref[...] + b_ref[...]).astype(o_ref.dtype)


def _round_up(a, m):
    return ((a + m - 1) // m) * m


def sym_view_pair_encoder(x, w5, bias, *, tm=None, tk=None):
    """
    x    : (B, 2, C_in, D, H, W)  float32
    w5   : (C_out, C_in, D, H, W) float32   -- full-spatial conv3d weight
    bias : (C_out,)               float32
    returns (B, 2*C_out) float32
    """
    B, V, C_in, D, H, W = x.shape
    assert V == 2, "SymViewPairEncoder expects exactly two views"
    C_out = w5.shape[0]
    K = C_in * D * H * W
    M = 2 * B

    # --- glue (all contiguous reshapes; no transpose of x) -------------------
    x2 = x.reshape(M, K)                 # row 2b = view 0 of example b, 2b+1 = view 1
    w_mat = w5.reshape(C_out, K).T       # (K, C_out); tiny one-time transform
    b_mat = bias.reshape(1, C_out)       # (1, C_out)

    # --- tile selection (respect (8,128) layout; clamp to problem size) ------
    if tm is None:
        tm = min(512, _round_up(M, 8))       # batch-tile: multiple of 8 sublanes
    if tk is None:
        tk = min(2048, _round_up(K, 128))    # K-tile: multiple of 128 lanes
    M_pad = _round_up(M, tm)
    K_pad = _round_up(K, tk)
    N_pad = _round_up(C_out, 128)            # lane-dense output / weight tiles

    if M_pad != M or K_pad != K:
        x2 = jnp.pad(x2, ((0, M_pad - M), (0, K_pad - K)))
    if K_pad != K or N_pad != C_out:
        w_mat = jnp.pad(w_mat, ((0, K_pad - K), (0, N_pad - C_out)))
    if N_pad != C_out:
        b_mat = jnp.pad(b_mat, ((0, 0), (0, N_pad - C_out)))

    grid = (M_pad // tm, K_pad // tk)

    out = pl.pallas_call(
        _sym_view_pair_kernel,
        out_shape=jax.ShapeDtypeStruct((M_pad, N_pad), jnp.float32),
        grid=grid,
        in_specs=[
            pl.BlockSpec((tm, tk), lambda i, k: (i, k)),       # x tile
            pl.BlockSpec((tk, N_pad), lambda i, k: (k, 0)),    # weight K-slice
            pl.BlockSpec((1, N_pad), lambda i, k: (0, 0)),     # bias (resident)
        ],
        out_specs=pl.BlockSpec((tm, N_pad), lambda i, k: (i, 0)),
        scratch_shapes=[pltpu.VMEM((tm, N_pad), jnp.float32)],
        compiler_params=pltpu.CompilerParams(
            # batch-tiles independent (megacore-shardable), K is a reduction.
            dimension_semantics=("parallel", "arbitrary"),
            # Raise v5e's 16 MiB scoped default; fits v7x's 64 MiB physical VMEM.
            vmem_limit_bytes=32 * 1024 * 1024,
        ),
    )(x2, w_mat, b_mat)

    # Slice off N/M padding, then (2B, C_out) -> (B, 2*C_out): contiguous
    # reshape == directsum channel order (view-0 channels first, then view-1).
    return out[:M, :C_out].reshape(B, 2 * C_out)
    # TODO(synk): optionally cast x/w to bfloat16 in the wrapper (keep f32
    # accumulation) to halve HBM traffic when the model tolerates it.


def _reference(x, w5, bias):
    """Pure-JAX reference: per-view full-spatial conv3d + bias, directsum, flatten."""
    y0 = jnp.einsum("bcdhw,ocdhw->bo", x[:, 0], w5) + bias
    y1 = jnp.einsum("bcdhw,ocdhw->bo", x[:, 1], w5) + bias
    return jnp.concatenate([y0, y1], axis=-1)


if __name__ == "__main__":
    # Small, deterministic shapes consistent with the module's forward:
    # two 3D views per example, encoder collapses spatial dims to 1.
    B, C_in, D, H, W = 2, 4, 4, 4, 4
    C_out = 32

    key = jax.random.PRNGKey(0)
    kx, kw, kb = jax.random.split(key, 3)
    x = jax.random.normal(kx, (B, 2, C_in, D, H, W), dtype=jnp.float32)
    w5 = 0.05 * jax.random.normal(kw, (C_out, C_in, D, H, W), dtype=jnp.float32)
    bias = 0.1 * jax.random.normal(kb, (C_out,), dtype=jnp.float32)

    out = sym_view_pair_encoder(x, w5, bias)
    out = jax.block_until_ready(out)

    ref = _reference(x, w5, bias)
    assert out.shape == (B, 2 * C_out), out.shape
    assert jnp.allclose(out, ref, atol=1e-4, rtol=1e-4), "mismatch vs reference"

    print("KERNEL_OK")
</pallas_src>

<mosaic_0001>
module attributes {stable_mosaic.version = 11 : i64} {
  func.func @_sym_view_pair_kernel(%arg0: i32, %arg1: i32, %arg2: memref<8x256xf32, #tpu.memory_space<vmem>>, %arg3: memref<256x128xf32, #tpu.memory_space<vmem>>, %arg4: memref<1x128xf32, #tpu.memory_space<vmem>>, %arg5: memref<8x128xf32, #tpu.memory_space<vmem>>, %arg6: memref<8x128xf32, #tpu.memory_space<vmem>>) attributes {dimension_semantics = [#tpu.dimension_semantics<parallel>, #tpu.dimension_semantics<arbitrary>], iteration_bounds = array<i64: 1, 1>, scalar_prefetch = 0 : i64, scratch_operands = 1 : i64, tpu.core_type = #tpu.core_type<tc>, window_params = [{transform_indices = @transform_0, window_bounds = array<i64: 8, 256>}, {transform_indices = @transform_1, window_bounds = array<i64: 256, 128>}, {pipeline_mode = #tpu.pipeline_mode<synchronous>, transform_indices = @transform_2, window_bounds = array<i64: 1, 128>}, {transform_indices = @transform_3, window_bounds = array<i64: 8, 128>}]} {
    %c0_i32 = arith.constant 0 : i32
    %0 = arith.cmpi eq, %arg1, %c0_i32 : i32
    %1 = arith.extui %0 : i1 to i32
    %c0_i32_0 = arith.constant 0 : i32
    %2 = arith.cmpi ne, %1, %c0_i32_0 : i32
    scf.if %2 {
      %cst_10 = arith.constant 0.000000e+00 : f32
      %12 = vector.broadcast %cst_10 : f32 to vector<8x128xf32>
      %c0_11 = arith.constant 0 : index
      %c0_12 = arith.constant 0 : index
      %13 = vector.load %arg6[%c0_11, %c0_12] : memref<8x128xf32, #tpu.memory_space<vmem>>, vector<8x128xf32>
      tpu.vector_store %arg6[%c0_11, %c0_12], %12 {strides = array<i32>} : memref<8x128xf32, #tpu.memory_space<vmem>>, vector<8x128xf32>,
    } else {
    }
    %c0 = arith.constant 0 : index
    %c0_1 = arith.constant 0 : index
    %3 = vector.load %arg6[%c0, %c0_1] : memref<8x128xf32, #tpu.memory_space<vmem>>, vector<8x128xf32>
    %c0_2 = arith.constant 0 : index
    %c0_3 = arith.constant 0 : index
    %4 = vector.load %arg2[%c0_2, %c0_3] : memref<8x256xf32, #tpu.memory_space<vmem>>, vector<8x256xf32>
    %c0_4 = arith.constant 0 : index
    %c0_5 = arith.constant 0 : index
    %5 = vector.load %arg3[%c0_4, %c0_5] : memref<256x128xf32, #tpu.memory_space<vmem>>, vector<256x128xf32>
    %cst = arith.constant dense<0.000000e+00> : vector<8x128xf32>
    %6 = tpu.matmul %4, %5, %cst {dimension_numbers = #tpu.dot_dimension_numbers<[1], [0], [0], [1], [0, 0, 1, 1], [], []>} : vector<8x256xf32>, vector<256x128xf32>, vector<8x128xf32> -> vector<8x128xf32>
    %7 = arith.addf %3, %6 : vector<8x128xf32>
    %c0_6 = arith.constant 0 : index
    %c0_7 = arith.constant 0 : index
    %8 = vector.load %arg6[%c0_6, %c0_7] : memref<8x128xf32, #tpu.memory_space<vmem>>, vector<8x128xf32>
    tpu.vector_store %arg6[%c0_6, %c0_7], %7 {strides = array<i32>} : memref<8x128xf32, #tpu.memory_space<vmem>>, vector<8x128xf32>,
    %c0_i32_8 = arith.constant 0 : i32
    %9 = arith.cmpi eq, %arg1, %c0_i32_8 : i32
    %10 = arith.extui %9 : i1 to i32
    %c0_i32_9 = arith.constant 0 : i32
    %11 = arith.cmpi ne, %10, %c0_i32_9 : i32
    scf.if %11 {
      %c0_10 = arith.constant 0 : index
      %c0_11 = arith.constant 0 : index
      %12 = vector.load %arg6[%c0_10, %c0_11] : memref<8x128xf32, #tpu.memory_space<vmem>>, vector<8x128xf32>
      %c0_12 = arith.constant 0 : index
      %c0_13 = arith.constant 0 : index
      %13 = vector.load %arg4[%c0_12, %c0_13] : memref<1x128xf32, #tpu.memory_space<vmem>>, vector<1x128xf32>
      %14 = vector.broadcast %13 : vector<1x128xf32> to vector<8x128xf32>
      %15 = arith.addf %12, %14 : vector<8x128xf32>
      %c0_14 = arith.constant 0 : index
      %c0_15 = arith.constant 0 : index
      %16 = vector.load %arg5[%c0_14, %c0_15] : memref<8x128xf32, #tpu.memory_space<vmem>>, vector<8x128xf32>
      tpu.vector_store %arg5[%c0_14, %c0_15], %15 {strides = array<i32>} : memref<8x128xf32, #tpu.memory_space<vmem>>, vector<8x128xf32>,
    } else {
    }
    return
  }
  func.func @transform_0(%arg0: i32, %arg1: i32) -> (i32, i32) {
    %c0_i32 = arith.constant 0 : i32
    return %arg0, %arg1 : i32, i32
  }
  func.func @transform_1(%arg0: i32, %arg1: i32) -> (i32, i32) {
    %c0_i32 = arith.constant 0 : i32
    %c0_i32_0 = arith.constant 0 : i32
    return %arg1, %c0_i32 : i32, i32
  }
  func.func @transform_2(%arg0: i32, %arg1: i32) -> (i32, i32) {
    %c0_i32 = arith.constant 0 : i32
    %c0_i32_0 = arith.constant 0 : i32
    %c0_i32_1 = arith.constant 0 : i32
    return %c0_i32, %c0_i32_0 : i32, i32
  }
  func.func @transform_3(%arg0: i32, %arg1: i32) -> (i32, i32) {
    %c0_i32 = arith.constant 0 : i32
    %c0_i32_0 = arith.constant 0 : i32
    return %arg0, %c0_i32 : i32, i32
  }
}

</mosaic_0001>

<llo_original>
// kernel: tpu_custom_call.1
$region0: #{tpu_custom_call.1}
  #allocation0 [shape = 'u32[]', space=smem, size = 0x4, offset = 0x4, fixed_abs, tag = 'smem constant byte address 0x4 - core index']
  #allocation1 [shape = 'u32[72,128]{1,0:T(1,128)}', space=vmem, size = 0x9000, scoped, tag = 'internal scratch']
  #allocation2 [shape = 'f32[8,128]{1,0:T(8,128)}', space=vmem, size = 0x1000, scoped, tag = 'scratch operand']
  %s0 = inlined_call_operand.hbm [shape: f32[8,256], index: 0, kind: input, shape index: {}]
  %s1 = inlined_call_operand.hbm [shape: f32[256,128], index: 1, kind: input, shape index: {}]
  %s2 = inlined_call_operand.vmem [shape: f32[1,128], index: 2, kind: input, shape index: {}]
  %s3 = inlined_call_operand.hbm [shape: f32[8,128], index: 3, kind: output, shape index: {}]
  %s4 = sld [smem:[#allocation0]]
  $region38: #{tpu_custom_call.1} parent=0
    _
  %s6 = ssub.s32 1, %s4
  %s7 = scalar_select 0, %s6, %s4
  $region1: #{tpu_custom_call.1} parent=0
    #allocation3 [shape = 'u8[8192]{0}', space=vmem, size = 0x2000, scoped, tag = 'input window, operand 0, single buffered']
    #allocation4 [shape = 's32[1]{0}', space=sflag, size = 0x4, scoped, tag = 'scoped memory for tpu_custom_call.1']
    #allocation5 [shape = 's32[1]{0}', space=sflag, size = 0x4, scoped, tag = 'scoped memory for tpu_custom_call.1']
    #allocation6 [shape = 'u8[131072]{0}', space=vmem, size = 0x20000, scoped, tag = 'input window, operand 1, single buffered']
    #allocation7 [shape = 's32[1]{0}', space=sflag, size = 0x4, scoped, tag = 'scoped memory for tpu_custom_call.1']
    #allocation8 [shape = 'u8[4096]{0}', space=vmem, size = 0x1000, scoped, tag = 'output window, operand 0, single buffered']
    %8 = vsyncpa [#allocation4], 0
    %9 = vsyncpa [#allocation7], 0
    %10 = vsyncpa [#allocation5], 0
    // Predicated region
    $region2: #{tpu_custom_call.1} parent=1 // pred_check
      _
    $region3: #{tpu_custom_call.1} parent=1 // pred_check_branch
      %12 = sbr.rel (0) target = $region5
    $region4: #{tpu_custom_call.1} parent=1 // pred_region
      %14 = vsyncadd [#allocation4], 0
      %s16 = sshll.u32 %s0, 4
      %s17 = int_to_ptr.hbm [resolvable:$true] %s16
      %s18 = sshll.u32 [#allocation3], 4
      %s19 = int_to_ptr.vmem [resolvable:$true] %s18
      %21 = dma.hbm_to_vmem [thread:$0]  %s17, 256, %s19, [#allocation4]
    $region5: #{tpu_custom_call.1} parent=1 // pred_fallthru
      _
    // Predicated region
    $region6: #{tpu_custom_call.1} parent=1 // pred_check
      _
    $region7: #{tpu_custom_call.1} parent=1 // pred_check_branch
      %23 = sbr.rel (0) target = $region9
    $region8: #{tpu_custom_call.1} parent=1 // pred_region
      %25 = vsyncadd [#allocation7], 0
      %s26 = sshll.u32 %s1, 4
      %s27 = int_to_ptr.hbm [resolvable:$true] %s26
      %s28 = sshll.u32 [#allocation6], 4
      %s29 = int_to_ptr.vmem [resolvable:$true] %s28
      %34 = dma.hbm_to_vmem [thread:$0]  %s27, 4096, %s29, [#allocation7], 128, 128, 8
    $region9: #{tpu_custom_call.1} parent=1 // pred_fallthru
      _
    // Predicated region
    $region10: #{tpu_custom_call.1} parent=1 // pred_check
      _
    $region11: #{tpu_custom_call.1} parent=1 // pred_check_branch
      %36 = sbr.rel (0) target = $region13
    $region12: #{tpu_custom_call.1} parent=1 // pred_region
      _
    $region13: #{tpu_custom_call.1} parent=1 // pred_fallthru
      _
    // Predicated region
    $region14: #{tpu_custom_call.1} parent=1 // pred_check
      _
    $region15: #{tpu_custom_call.1} parent=1 // pred_check_branch
      %38 = sbr.rel (0) target = $region17
    $region16: #{tpu_custom_call.1} parent=1 // pred_region
      %40 = dma.done [#allocation4], 256
    $region17: #{tpu_custom_call.1} parent=1 // pred_fallthru
      _
    // Predicated region
    $region18: #{tpu_custom_call.1} parent=1 // pred_check
      _
    $region19: #{tpu_custom_call.1} parent=1 // pred_check_branch
      %42 = sbr.rel (0) target = $region21
    $region20: #{tpu_custom_call.1} parent=1 // pred_region
      %44 = dma.done [#allocation7], 4096
    $region21: #{tpu_custom_call.1} parent=1 // pred_fallthru
      _
    %p45 = scmp.eq.s32.totalorder 0, 0
    // Predicated region
    $region22: #{tpu_custom_call.1} parent=1 // pred_check
      %p46 = pneg %p45
    $region23: #{tpu_custom_call.1} parent=1 // pred_check_branch
      %48 = sbr.rel (%p46) target = $region25
    $region24: #{tpu_custom_call.1} parent=1 // pred_region
      %49 = vst [vmem:[#allocation2] sm:$0xff] 0.0
    $region25: #{tpu_custom_call.1} parent=1 // pred_fallthru
      _
    %v50 = vld [vmem:[#allocation2] sm:$0xff]
    %v51 = vld [vmem:[#allocation3] sm:$0xff]
    %v52 = vld [vmem:[#allocation3 + $0x8] sm:$0xff]
    %v53 = vld [vmem:[#allocation6] sm:$0xff]
    %v54 = vld [vmem:[#allocation6 + $0x8] sm:$0xff]
    %v55 = vld [vmem:[#allocation6 + $0x10] sm:$0xff]
    %v56 = vld [vmem:[#allocation6 + $0x18] sm:$0xff]
    %v57 = vld [vmem:[#allocation6 + $0x20] sm:$0xff]
    %v58 = vld [vmem:[#allocation6 + $0x28] sm:$0xff]
    %v59 = vld [vmem:[#allocation6 + $0x30] sm:$0xff]
    %v60 = vld [vmem:[#allocation6 + $0x38] sm:$0xff]
    %v61 = vld [vmem:[#allocation6 + $0x40] sm:$0xff]
    %v62 = vld [vmem:[#allocation6 + $0x48] sm:$0xff]
    %v63 = vld [vmem:[#allocation6 + $0x50] sm:$0xff]
    %v64 = vld [vmem:[#allocation6 + $0x58] sm:$0xff]
    %v65 = vld [vmem:[#allocation6 + $0x60] sm:$0xff]
    %v66 = vld [vmem:[#allocation6 + $0x68] sm:$0xff]
    %v67 = vld [vmem:[#allocation6 + $0x70] sm:$0xff]
    %v68 = vld [vmem:[#allocation6 + $0x78] sm:$0xff]
    %v69 = vld [vmem:[#allocation6 + $0x80] sm:$0xff]
    %v70 = vld [vmem:[#allocation6 + $0x88] sm:$0xff]
    %v71 = vld [vmem:[#allocation6 + $0x90] sm:$0xff]
    %v72 = vld [vmem:[#allocation6 + $0x98] sm:$0xff]
    %v73 = vld [vmem:[#allocation6 + $0xa0] sm:$0xff]
    %v74 = vld [vmem:[#allocation6 + $0xa8] sm:$0xff]
    %v75 = vld [vmem:[#allocation6 + $0xb0] sm:$0xff]
    %v76 = vld [vmem:[#allocation6 + $0xb8] sm:$0xff]
    %v77 = vld [vmem:[#allocation6 + $0xc0] sm:$0xff]
    %v78 = vld [vmem:[#allocation6 + $0xc8] sm:$0xff]
    %v79 = vld [vmem:[#allocation6 + $0xd0] sm:$0xff]
    %v80 = vld [vmem:[#allocation6 + $0xd8] sm:$0xff]
    %v81 = vld [vmem:[#allocation6 + $0xe0] sm:$0xff]
    %v82 = vld [vmem:[#allocation6 + $0xe8] sm:$0xff]
    %v83 = vld [vmem:[#allocation6 + $0xf0] sm:$0xff]
    %v84 = vld [vmem:[#allocation6 + $0xf8] sm:$0xff]
    %85 = vmatpush.msra.mxu0 %v68
    %86 = vmatpush.msra.mxu0 %v67
    %87 = vmatpush.msra.mxu0 %v66
    %88 = vmatpush.msra.mxu0 %v65
    %89 = vmatpush.msra.mxu0 %v64
    %90 = vmatpush.msra.mxu0 %v63
    %91 = vmatpush.msra.mxu0 %v62
    %92 = vmatpush.msra.mxu0 %v61
    %93 = vmatpush.msra.mxu0 %v60
    %94 = vmatpush.msra.mxu0 %v59
    %95 = vmatpush.msra.mxu0 %v58
    %96 = vmatpush.msra.mxu0 %v57
    %97 = vmatpush.msra.mxu0 %v56
    %98 = vmatpush.msra.mxu0 %v55
    %99 = vmatpush.msra.mxu0 %v54
    %100 = vmatpush.msra.mxu0 %v53
    %101 = vmatmul.f32.gmra.mxu0 %v51
    %v102 = vpop.f32.mrf.mxu0
    %v103 = vadd.f32 0.0, %v102
    %104 = vdwg.mxu0
    %105 = vmatpush.msra.mxu0 %v84
    %106 = vmatpush.msra.mxu0 %v83
    %107 = vmatpush.msra.mxu0 %v82
    %108 = vmatpush.msra.mxu0 %v81
    %109 = vmatpush.msra.mxu0 %v80
    %110 = vmatpush.msra.mxu0 %v79
    %111 = vmatpush.msra.mxu0 %v78
    %112 = vmatpush.msra.mxu0 %v77
    %113 = vmatpush.msra.mxu0 %v76
    %114 = vmatpush.msra.mxu0 %v75
    %115 = vmatpush.msra.mxu0 %v74
    %116 = vmatpush.msra.mxu0 %v73
    %117 = vmatpush.msra.mxu0 %v72
    %118 = vmatpush.msra.mxu0 %v71
    %119 = vmatpush.msra.mxu0 %v70
    %120 = vmatpush.msra.mxu0 %v69
    %121 = vmatmul.f32.gmra.mxu0 %v52
    %v122 = vpop.f32.mrf.mxu0
    %v123 = vadd.f32 %v103, %v122
    %124 = vdwg.mxu0
    %v125 = vadd.f32 %v50, %v123
    %126 = vst [vmem:[#allocation2] sm:$0xff] %v125
    // Predicated region
    $region26: #{tpu_custom_call.1} parent=1 // pred_check
      %p127 = pneg %p45
    $region27: #{tpu_custom_call.1} parent=1 // pred_check_branch
      %129 = sbr.rel (%p127) target = $region29
    $region28: #{tpu_custom_call.1} parent=1 // pred_region
      %v130 = vld [vmem:[#allocation2] sm:$0xff]
      %v131 = vld [vmem:[%s2] sm:$0x1]
      %v133 = vperm.slane %v131, 0
      %v135 = vadd.f32 %v130, %v133
      %136 = vst [vmem:[#allocation8] sm:$0xff] %v135
    $region29: #{tpu_custom_call.1} parent=1 // pred_fallthru
      _
    // Predicated region
    $region30: #{tpu_custom_call.1} parent=1 // pred_check
      _
    $region31: #{tpu_custom_call.1} parent=1 // pred_check_branch
      %138 = sbr.rel (0) target = $region33
    $region32: #{tpu_custom_call.1} parent=1 // pred_region
      %140 = vsyncadd [#allocation5], 0
      %s142 = sshll.u32 [#allocation8], 4
      %s143 = int_to_ptr.vmem [resolvable:$true] %s142
      %s144 = sshll.u32 %s3, 4
      %s145 = int_to_ptr.hbm [resolvable:$true] %s144
      %147 = dma.vmem_to_hbm [thread:$0]  %s143, 128, %s145, [#allocation5]
    $region33: #{tpu_custom_call.1} parent=1 // pred_fallthru
      _
    // Predicated region
    $region34: #{tpu_custom_call.1} parent=1 // pred_check
      _
    $region35: #{tpu_custom_call.1} parent=1 // pred_check_branch
      %149 = sbr.rel (0) target = $region37
    $region36: #{tpu_custom_call.1} parent=1 // pred_region
      %151 = dma.done [#allocation5], 128
    $region37: #{tpu_custom_call.1} parent=1 // pred_fallthru
      _
    %152 = vsyncpa [#allocation4], 1
    %153 = vsyncpa [#allocation7], 1
    %154 = vsyncpa [#allocation5], 1

</llo_original>
